<compile_context>
chip_gen: v7x
topology: tpu7x:2x2x1
jax: 0.10.0
libtpu: 0.0.40
codegen_flags: <defaults>
</compile_context>

<pallas_src>
import jax
import jax.numpy as jnp
from jax.experimental import pallas as pl
from jax.experimental.pallas import tpu as pltpu


def actor_kernel(s_ref, w1_ref, vec_ref, w2_ref, w3_ref, out_ref):
    # Static widths inferred from refs at trace time.
    fc1 = w1_ref.shape[1]
    fc2 = w2_ref.shape[1]
    n_pad = w3_ref.shape[1]

    x = s_ref[...]

    # fc1 -- bias omitted on purpose (cancels in training-mode BatchNorm).
    h1 = jnp.dot(x, w1_ref[...], preferred_element_type=jnp.float32)

    # BatchNorm1d (training mode): batch mean, biased variance, eps=1e-5.
    # Two independent sublane reductions (overlap on XLU) instead of a
    # serialized mean -> center -> square -> reduce chain.
    inv_b = jnp.float32(1.0 / h1.shape[0])
    sum1 = jnp.sum(h1, axis=0, keepdims=True)
    sum2 = jnp.sum(h1 * h1, axis=0, keepdims=True)
    mean = sum1 * inv_b
    var = sum2 * inv_b - mean * mean  # biased variance; mild cancellation caveat

    gamma = vec_ref[0:1, :fc1]
    beta = vec_ref[1:2, :fc1]
    scale = gamma * jax.lax.rsqrt(var + 1e-5)   # (1, fc1)
    shift = beta - mean * scale                 # (1, fc1)

    # Normalize + affine + relu: single mul + add on the (B, fc1) tensor.
    a1 = jnp.maximum(h1 * scale + shift, 0.0)

    # fc2 + relu
    b2 = vec_ref[2:3, :fc2]
    a2 = jnp.maximum(
        jnp.dot(a1, w2_ref[...], preferred_element_type=jnp.float32) + b2,
        0.0,
    )

    # fc3 + tanh -- output is lane-dense (padded to a multiple of 128 lanes).
    b3 = vec_ref[3:4, :n_pad]
    out_ref[...] = jnp.tanh(
        jnp.dot(a2, w3_ref[...], preferred_element_type=jnp.float32) + b3
    )


@jax.jit
def actor_forward(state, w1_t, vec_pack, w2_t, w3_pad):
    """Fused Actor forward on pre-packed params (see prepare_params).

    Returns the lane-padded (B, n_pad) output; columns >= action_size are
    tanh(0) = 0 and can be sliced off by the caller if needed.
    """
    B = state.shape[0]
    n_pad = w3_pad.shape[1]
    vmem = pl.BlockSpec(memory_space=pltpu.MemorySpace.VMEM)
    return pl.pallas_call(
        actor_kernel,
        out_shape=jax.ShapeDtypeStruct((B, n_pad), jnp.float32),
        in_specs=[vmem] * 5,
        out_specs=vmem,
    )(state, w1_t, vec_pack, w2_t, w3_pad)


def prepare_params(w1, b1, gamma, beta, w2, b2, w3, b3):
    """One-time parameter packing (amortized over every forward call).

    * Transposes weights to (in, out).
    * Drops b1: it cancels exactly under training-mode BatchNorm.
    * Zero-pads fc3's output dim to a multiple of 128 lanes (unmasked vst,
      clean MXU N); padded columns produce tanh(0)=0.
    * Packs gamma / beta / b2 / b3 into a single (4, Wmax) array so the
      kernel needs one DMA instead of four for the small vectors.
    """
    del b1  # mathematically a no-op under batch-statistics BatchNorm
    fc1 = w1.shape[0]
    fc2 = w2.shape[0]
    act = w3.shape[0]
    n_pad = ((act + 127) // 128) * 128

    w1_t = w1.T                                            # (state, fc1)
    w2_t = w2.T                                            # (fc1, fc2)
    w3_pad = jnp.pad(w3.T, ((0, 0), (0, n_pad - act)))     # (fc2, n_pad)

    wmax = max(fc1, fc2, n_pad)

    def row(v):
        v = jnp.reshape(v, (1, -1)).astype(jnp.float32)
        return jnp.pad(v, ((0, 0), (0, wmax - v.shape[1])))

    vec_pack = jnp.concatenate([row(gamma), row(beta), row(b2), row(b3)], axis=0)

    return (w1_t.astype(jnp.float32), vec_pack,
            w2_t.astype(jnp.float32), w3_pad.astype(jnp.float32))


def actor_reference(state, w1, b1, gamma, beta, w2, b2, w3, b3):
    """Pure-JAX reference with the full PyTorch formula (b1 included)."""
    h1 = state @ w1.T + b1
    mean = jnp.mean(h1, axis=0, keepdims=True)
    var = jnp.mean((h1 - mean) ** 2, axis=0, keepdims=True)
    h1n = (h1 - mean) / jnp.sqrt(var + 1e-5) * gamma + beta
    a1 = jnp.maximum(h1n, 0.0)
    a2 = jnp.maximum(a1 @ w2.T + b2, 0.0)
    return jnp.tanh(a2 @ w3.T + b3)


def make_params(key, state_size, action_size, fc1_units, fc2_units):
    """Deterministic init mimicking Actor.__init__ / reset_parameters
    (PyTorch layout: weights are (out_features, in_features))."""
    ks = jax.random.split(key, 6)

    # reset_parameters: fc1/fc2 weights ~ U(-1/sqrt(weight.size(0)), ...)
    # (PyTorch code uses weight.size(0) == out_features as "fan_in" -- keep quirk)
    lim1 = 1.0 / jnp.sqrt(jnp.float32(fc1_units))
    lim2 = 1.0 / jnp.sqrt(jnp.float32(fc2_units))
    w1 = jax.random.uniform(ks[0], (fc1_units, state_size), jnp.float32, -lim1, lim1)
    w2 = jax.random.uniform(ks[1], (fc2_units, fc1_units), jnp.float32, -lim2, lim2)
    w3 = jax.random.uniform(ks[2], (action_size, fc2_units), jnp.float32, -3e-3, 3e-3)

    # nn.Linear default bias init: U(-1/sqrt(in_features), 1/sqrt(in_features))
    bl1 = 1.0 / jnp.sqrt(jnp.float32(state_size))
    bl2 = 1.0 / jnp.sqrt(jnp.float32(fc1_units))
    bl3 = 1.0 / jnp.sqrt(jnp.float32(fc2_units))
    b1 = jax.random.uniform(ks[3], (fc1_units,), jnp.float32, -bl1, bl1)
    b2 = jax.random.uniform(ks[4], (fc2_units,), jnp.float32, -bl2, bl2)
    b3 = jax.random.uniform(ks[5], (action_size,), jnp.float32, -bl3, bl3)

    # BatchNorm1d affine params
    gamma = jnp.ones((fc1_units,), jnp.float32)
    beta = jnp.zeros((fc1_units,), jnp.float32)

    return w1, b1, gamma, beta, w2, b2, w3, b3


if __name__ == "__main__":
    key = jax.random.PRNGKey(0)
    kp, ks = jax.random.split(key)

    # Small shapes consistent with the module's forward.
    B, state_size, action_size = 8, 16, 8
    fc1_units, fc2_units = 128, 128

    raw_params = make_params(kp, state_size, action_size, fc1_units, fc2_units)
    packed_params = prepare_params(*raw_params)   # one-time packing, not per-call
    state = jax.random.normal(ks, (B, state_size), jnp.float32)

    out_padded = actor_forward(state, *packed_params)
    jax.block_until_ready(out_padded)

    out = out_padded[:, :action_size]             # outside the hot path
    ref = actor_reference(state, *raw_params)
    assert out.shape == (B, action_size)
    assert jnp.allclose(out, ref, atol=1e-5, rtol=1e-5), "mismatch vs reference"

    print("KERNEL_OK")
</pallas_src>

<mosaic_0001>
module attributes {stable_mosaic.version = 11 : i64} {
  func.func @actor_kernel(%arg0: memref<8x16xf32, #tpu.memory_space<vmem>>, %arg1: memref<16x128xf32, #tpu.memory_space<vmem>>, %arg2: memref<4x128xf32, #tpu.memory_space<vmem>>, %arg3: memref<128x128xf32, #tpu.memory_space<vmem>>, %arg4: memref<128x128xf32, #tpu.memory_space<vmem>>, %arg5: memref<8x128xf32, #tpu.memory_space<vmem>>) attributes {dimension_semantics = [], scalar_prefetch = 0 : i64, scratch_operands = 0 : i64, tpu.core_type = #tpu.core_type<tc>} {
    %c0 = arith.constant 0 : index
    %c0_0 = arith.constant 0 : index
    %0 = vector.load %arg0[%c0, %c0_0] : memref<8x16xf32, #tpu.memory_space<vmem>>, vector<8x16xf32>
    %c0_1 = arith.constant 0 : index
    %c0_2 = arith.constant 0 : index
    %1 = vector.load %arg1[%c0_1, %c0_2] : memref<16x128xf32, #tpu.memory_space<vmem>>, vector<16x128xf32>
    %cst = arith.constant dense<0.000000e+00> : vector<8x128xf32>
    %2 = tpu.matmul %0, %1, %cst {dimension_numbers = #tpu.dot_dimension_numbers<[1], [0], [0], [1], [0, 0, 1, 1], [], []>} : vector<8x16xf32>, vector<16x128xf32>, vector<8x128xf32> -> vector<8x128xf32>
    %cst_3 = arith.constant dense<0.000000e+00> : vector<128xf32>
    %3 = vector.multi_reduction <add>, %2, %cst_3 [0] : vector<8x128xf32> to vector<128xf32>
    %4 = vector.shape_cast %3 : vector<128xf32> to vector<1x128xf32>
    %5 = arith.mulf %2, %2 : vector<8x128xf32>
    %cst_4 = arith.constant dense<0.000000e+00> : vector<128xf32>
    %6 = vector.multi_reduction <add>, %5, %cst_4 [0] : vector<8x128xf32> to vector<128xf32>
    %7 = vector.shape_cast %6 : vector<128xf32> to vector<1x128xf32>
    %cst_5 = arith.constant 1.250000e-01 : f32
    %8 = vector.broadcast %cst_5 : f32 to vector<1x128xf32>
    %9 = arith.mulf %4, %8 : vector<1x128xf32>
    %cst_6 = arith.constant 1.250000e-01 : f32
    %10 = vector.broadcast %cst_6 : f32 to vector<1x128xf32>
    %11 = arith.mulf %7, %10 : vector<1x128xf32>
    %12 = arith.mulf %9, %9 : vector<1x128xf32>
    %13 = arith.subf %11, %12 : vector<1x128xf32>
    %c0_7 = arith.constant 0 : index
    %c0_8 = arith.constant 0 : index
    %14 = vector.load %arg2[%c0_7, %c0_8] : memref<4x128xf32, #tpu.memory_space<vmem>>, vector<1x128xf32>
    %c1 = arith.constant 1 : index
    %c0_9 = arith.constant 0 : index
    %15 = vector.load %arg2[%c1, %c0_9] : memref<4x128xf32, #tpu.memory_space<vmem>>, vector<1x128xf32>
    %cst_10 = arith.constant 9.99999974E-6 : f32
    %16 = vector.broadcast %cst_10 : f32 to vector<1x128xf32>
    %17 = arith.addf %13, %16 : vector<1x128xf32>
    %18 = math.rsqrt %17 : vector<1x128xf32>
    %19 = arith.mulf %14, %18 : vector<1x128xf32>
    %20 = arith.mulf %9, %19 : vector<1x128xf32>
    %21 = arith.subf %15, %20 : vector<1x128xf32>
    %22 = vector.broadcast %19 : vector<1x128xf32> to vector<8x128xf32>
    %23 = arith.mulf %2, %22 : vector<8x128xf32>
    %24 = vector.broadcast %21 : vector<1x128xf32> to vector<8x128xf32>
    %25 = arith.addf %23, %24 : vector<8x128xf32>
    %cst_11 = arith.constant 0.000000e+00 : f32
    %26 = vector.broadcast %cst_11 : f32 to vector<8x128xf32>
    %27 = arith.maximumf %25, %26 : vector<8x128xf32>
    %c2 = arith.constant 2 : index
    %c0_12 = arith.constant 0 : index
    %28 = vector.load %arg2[%c2, %c0_12] : memref<4x128xf32, #tpu.memory_space<vmem>>, vector<1x128xf32>
    %c0_13 = arith.constant 0 : index
    %c0_14 = arith.constant 0 : index
    %29 = vector.load %arg3[%c0_13, %c0_14] : memref<128x128xf32, #tpu.memory_space<vmem>>, vector<128x128xf32>
    %cst_15 = arith.constant dense<0.000000e+00> : vector<8x128xf32>
    %30 = tpu.matmul %27, %29, %cst_15 {dimension_numbers = #tpu.dot_dimension_numbers<[1], [0], [0], [1], [0, 0, 1, 1], [], []>} : vector<8x128xf32>, vector<128x128xf32>, vector<8x128xf32> -> vector<8x128xf32>
    %31 = vector.broadcast %28 : vector<1x128xf32> to vector<8x128xf32>
    %32 = arith.addf %30, %31 : vector<8x128xf32>
    %cst_16 = arith.constant 0.000000e+00 : f32
    %33 = vector.broadcast %cst_16 : f32 to vector<8x128xf32>
    %34 = arith.maximumf %32, %33 : vector<8x128xf32>
    %c3 = arith.constant 3 : index
    %c0_17 = arith.constant 0 : index
    %35 = vector.load %arg2[%c3, %c0_17] : memref<4x128xf32, #tpu.memory_space<vmem>>, vector<1x128xf32>
    %c0_18 = arith.constant 0 : index
    %c0_19 = arith.constant 0 : index
    %36 = vector.load %arg4[%c0_18, %c0_19] : memref<128x128xf32, #tpu.memory_space<vmem>>, vector<128x128xf32>
    %cst_20 = arith.constant dense<0.000000e+00> : vector<8x128xf32>
    %37 = tpu.matmul %34, %36, %cst_20 {dimension_numbers = #tpu.dot_dimension_numbers<[1], [0], [0], [1], [0, 0, 1, 1], [], []>} : vector<8x128xf32>, vector<128x128xf32>, vector<8x128xf32> -> vector<8x128xf32>
    %38 = vector.broadcast %35 : vector<1x128xf32> to vector<8x128xf32>
    %39 = arith.addf %37, %38 : vector<8x128xf32>
    %40 = math.tanh %39 : vector<8x128xf32>
    %c0_21 = arith.constant 0 : index
    %c0_22 = arith.constant 0 : index
    %41 = vector.load %arg5[%c0_21, %c0_22] : memref<8x128xf32, #tpu.memory_space<vmem>>, vector<8x128xf32>
    tpu.vector_store %arg5[%c0_21, %c0_22], %40 {strides = array<i32>} : memref<8x128xf32, #tpu.memory_space<vmem>>, vector<8x128xf32>,
    return
  }
}

</mosaic_0001>

<llo_original>
// kernel: actor_forward.1
$region0: #{actor_forward.1}
  #allocation0 [shape = 'u32[]', space=smem, size = 0x4, offset = 0x4, fixed_abs, tag = 'smem constant byte address 0x4 - core index']
  #allocation1 [shape = 'u32[144,128]{1,0:T(1,128)}', space=vmem, size = 0x12000, scoped, tag = 'internal scratch']
  %s0 = inlined_call_operand.hbm [shape: f32[8,16], index: 0, kind: input, shape index: {}]
  %s1 = inlined_call_operand.hbm [shape: f32[16,128], index: 1, kind: input, shape index: {}]
  %s2 = inlined_call_operand.vmem [shape: f32[4,128], index: 2, kind: input, shape index: {}]
  %s3 = inlined_call_operand.hbm [shape: f32[128,128], index: 3, kind: input, shape index: {}]
  %s4 = inlined_call_operand.hbm [shape: f32[128,128], index: 4, kind: input, shape index: {}]
  %s5 = inlined_call_operand.hbm [shape: f32[8,128], index: 5, kind: output, shape index: {}]
  %s6 = sld [smem:[#allocation0]]
  $region46: #{actor_forward.1} parent=0
    _
  %s8 = ssub.s32 1, %s6
  %s9 = scalar_select 0, %s8, %s6
  $region1: #{actor_forward.1} parent=0
    #allocation2 [shape = 'u8[4096]{0}', space=vmem, size = 0x1000, scoped, tag = 'input window, operand 0, single buffered']
    #allocation3 [shape = 's32[1]{0}', space=sflag, size = 0x4, scoped, tag = 'scoped memory for actor_forward.1']
    #allocation4 [shape = 's32[1]{0}', space=sflag, size = 0x4, scoped, tag = 'scoped memory for actor_forward.1']
    #allocation5 [shape = 'u8[8192]{0}', space=vmem, size = 0x2000, scoped, tag = 'input window, operand 1, single buffered']
    #allocation6 [shape = 's32[1]{0}', space=sflag, size = 0x4, scoped, tag = 'scoped memory for actor_forward.1']
    #allocation7 [shape = 'u8[65536]{0}', space=vmem, size = 0x10000, scoped, tag = 'input window, operand 3, single buffered']
    #allocation8 [shape = 'u8[65536]{0}', space=vmem, size = 0x10000, scoped, tag = 'input window, operand 4, single buffered']
    #allocation9 [shape = 's32[1]{0}', space=sflag, size = 0x4, scoped, tag = 'scoped memory for actor_forward.1']
    #allocation10 [shape = 'u8[4096]{0}', space=vmem, size = 0x1000, scoped, tag = 'output window, operand 0, single buffered']
    %10 = vsyncpa [#allocation3], 0
    %11 = vsyncpa [#allocation6], 0
    %12 = vsyncpa [#allocation9], 0
    %13 = vsyncpa [#allocation4], 0
    // Predicated region
    $region2: #{actor_forward.1} parent=1 // pred_check
      _
    $region3: #{actor_forward.1} parent=1 // pred_check_branch
      %15 = sbr.rel (0) target = $region5
    $region4: #{actor_forward.1} parent=1 // pred_region
      %s17 = ssub.s32 128, 128
      %18 = vsyncadd [#allocation3], %s17
      %s20 = sshll.u32 [#allocation2], 4
      %s21 = int_to_ptr.vmem [resolvable:$true] %s20
      %23 = dma.hbm_to_vmem [thread:$0]  %s0, 128, %s21, [#allocation3]
    $region5: #{actor_forward.1} parent=1 // pred_fallthru
      _
    // Predicated region
    $region6: #{actor_forward.1} parent=1 // pred_check
      _
    $region7: #{actor_forward.1} parent=1 // pred_check_branch
      %25 = sbr.rel (0) target = $region9
    $region8: #{actor_forward.1} parent=1 // pred_region
      %s27 = ssub.s32 256, 256
      %28 = vsyncadd [#allocation6], %s27
      %s29 = sshll.u32 [#allocation5], 4
      %s30 = int_to_ptr.vmem [resolvable:$true] %s29
      %35 = dma.hbm_to_vmem [thread:$0]  %s1, 256, %s30, [#allocation6], 128, 128, 8
    $region9: #{actor_forward.1} parent=1 // pred_fallthru
      _
    // Predicated region
    $region10: #{actor_forward.1} parent=1 // pred_check
      _
    $region11: #{actor_forward.1} parent=1 // pred_check_branch
      %37 = sbr.rel (0) target = $region13
    $region12: #{actor_forward.1} parent=1 // pred_region
      _
    $region13: #{actor_forward.1} parent=1 // pred_fallthru
      _
    // Predicated region
    $region14: #{actor_forward.1} parent=1 // pred_check
      _
    $region15: #{actor_forward.1} parent=1 // pred_check_branch
      %39 = sbr.rel (0) target = $region17
    $region16: #{actor_forward.1} parent=1 // pred_region
      %s41 = ssub.s32 2048, 2048
      %42 = vsyncadd [#allocation6], %s41
      %s43 = sshll.u32 [#allocation7], 4
      %s44 = int_to_ptr.vmem [resolvable:$true] %s43
      %49 = dma.hbm_to_vmem [thread:$0]  %s3, 2048, %s44, [#allocation6], 128, 128, 8
    $region17: #{actor_forward.1} parent=1 // pred_fallthru
      _
    // Predicated region
    $region18: #{actor_forward.1} parent=1 // pred_check
      _
    $region19: #{actor_forward.1} parent=1 // pred_check_branch
      %51 = sbr.rel (0) target = $region21
    $region20: #{actor_forward.1} parent=1 // pred_region
      %s53 = ssub.s32 2048, 2048
      %54 = vsyncadd [#allocation9], %s53
      %s55 = sshll.u32 [#allocation8], 4
      %s56 = int_to_ptr.vmem [resolvable:$true] %s55
      %61 = dma.hbm_to_vmem [thread:$0]  %s4, 2048, %s56, [#allocation9], 128, 128, 8
    $region21: #{actor_forward.1} parent=1 // pred_fallthru
      _
    // Predicated region
    $region22: #{actor_forward.1} parent=1 // pred_check
      _
    $region23: #{actor_forward.1} parent=1 // pred_check_branch
      %63 = sbr.rel (0) target = $region25
    $region24: #{actor_forward.1} parent=1 // pred_region
      %64 = dma.done [#allocation3], 128
    $region25: #{actor_forward.1} parent=1 // pred_fallthru
      _
    // Predicated region
    $region26: #{actor_forward.1} parent=1 // pred_check
      _
    $region27: #{actor_forward.1} parent=1 // pred_check_branch
      %66 = sbr.rel (0) target = $region29
    $region28: #{actor_forward.1} parent=1 // pred_region
      %67 = dma.done [#allocation6], 256
    $region29: #{actor_forward.1} parent=1 // pred_fallthru
      _
    // Predicated region
    $region30: #{actor_forward.1} parent=1 // pred_check
      _
    $region31: #{actor_forward.1} parent=1 // pred_check_branch
      %69 = sbr.rel (0) target = $region33
    $region32: #{actor_forward.1} parent=1 // pred_region
      %70 = dma.done [#allocation6], 2048
    $region33: #{actor_forward.1} parent=1 // pred_fallthru
      _
    // Predicated region
    $region34: #{actor_forward.1} parent=1 // pred_check
      _
    $region35: #{actor_forward.1} parent=1 // pred_check_branch
      %72 = sbr.rel (0) target = $region37
    $region36: #{actor_forward.1} parent=1 // pred_region
      %73 = dma.done [#allocation9], 2048
    $region37: #{actor_forward.1} parent=1 // pred_fallthru
      _
    %v74 = vld [vmem:[#allocation2] sm:$0xff]
    %v75 = vld [vmem:[#allocation5] sm:$0xff]
    %v76 = vld [vmem:[#allocation5 + $0x8] sm:$0xff]
    %vm77 = vcmask 130048
    %v79 = vsel %vm77, %v74, 0
    %81 = vmatprep.subr.mxu0 0.0
    %82 = vmatpush1.msra.mxu0 %v75
    %83 = vmatprep.subr.mxu0 0.0
    %84 = vmatpush1.msra.mxu0 %v76
    %85 = vmatprep.subr.mxu0 0.0
    %86 = vmatpush1.msra.mxu0 0.0
    %87 = vmatprep.subr.mxu0 0.0
    %88 = vmatpush1.msra.mxu0 0.0
    %89 = vmatprep.subr.mxu0 0.0
    %90 = vmatpush1.msra.mxu0 0.0
    %91 = vmatprep.subr.mxu0 0.0
    %92 = vmatpush1.msra.mxu0 0.0
    %93 = vmatprep.subr.mxu0 0.0
    %94 = vmatpush1.msra.mxu0 0.0
    %95 = vmatprep.subr.mxu0 0.0
    %96 = vmatpush1.msra.mxu0 0.0
    %97 = vmatprep.subr.mxu0 0.0
    %98 = vmatpush1.msra.mxu0 0.0
    %99 = vmatprep.subr.mxu0 0.0
    %100 = vmatpush1.msra.mxu0 0.0
    %101 = vmatprep.subr.mxu0 0.0
    %102 = vmatpush1.msra.mxu0 0.0
    %103 = vmatprep.subr.mxu0 0.0
    %104 = vmatpush1.msra.mxu0 0.0
    %105 = vmatprep.subr.mxu0 0.0
    %106 = vmatpush1.msra.mxu0 0.0
    %107 = vmatprep.subr.mxu0 0.0
    %108 = vmatpush1.msra.mxu0 0.0
    %109 = vmatprep.subr.mxu0 0.0
    %110 = vmatpush1.msra.mxu0 0.0
    %111 = vmatprep.subr.mxu0 0.0
    %112 = vmatpush1.msra.mxu0 0.0
    %113 = vmatprep.subr.mxu0 0.0
    %114 = vmatpush1.msra.mxu0 0.0
    %115 = vmatprep.subr.mxu0 0.0
    %116 = vmatpush1.msra.mxu0 0.0
    %117 = vmatprep.subr.mxu0 0.0
    %118 = vmatpush1.msra.mxu0 0.0
    %119 = vmatprep.subr.mxu0 0.0
    %120 = vmatpush1.msra.mxu0 0.0
    %121 = vmatprep.subr.mxu0 0.0
    %122 = vmatpush1.msra.mxu0 0.0
    %123 = vmatprep.subr.mxu0 0.0
    %124 = vmatpush1.msra.mxu0 0.0
    %125 = vmatprep.subr.mxu0 0.0
    %126 = vmatpush1.msra.mxu0 0.0
    %127 = vmatprep.subr.mxu0 0.0
    %128 = vmatpush1.msra.mxu0 0.0
    %129 = vmatprep.subr.mxu0 0.0
    %130 = vmatpush1.msra.mxu0 0.0
    %131 = vmatprep.subr.mxu0 0.0
    %132 = vmatpush1.msra.mxu0 0.0
    %133 = vmatprep.subr.mxu0 0.0
    %134 = vmatpush1.msra.mxu0 0.0
    %135 = vmatprep.subr.mxu0 0.0
    %136 = vmatpush1.msra.mxu0 0.0
    %137 = vmatprep.subr.mxu0 0.0
    %138 = vmatpush1.msra.mxu0 0.0
    %139 = vmatprep.subr.mxu0 0.0
    %140 = vmatpush1.msra.mxu0 0.0
    %141 = vmatprep.subr.mxu0 0.0
    %142 = vmatpush1.msra.mxu0 0.0
    %143 = vmatprep.subr.mxu0 0.0
    %144 = vmatpush1.msra.mxu0 0.0
    %145 = vmatprep.mubr.f32.mxu0 0.0
    %146 = vmatmul.mubr.f32.gmra.mrb[0].mxu0 %v79
    %v147 = vpop.f32.mrb[0].mxu0
    %v148 = vadd.f32 0.0, %v147
    %v149 = vpop.f32.mrb[0].mxu0
    %150 = vdwg.mxu0
    %v151 = vrot.slane %v148, 4
    %v152 = vadd.f32 %v148, %v151
    %v153 = vrot.slane %v152, 2
    %v154 = vadd.f32 %v152, %v153
    %v155 = vrot.slane %v154, 1
    %v156 = vadd.f32 %v154, %v155
    %v157 = vmul.f32 %v148, %v148
    %v158 = vrot.slane %v157, 4
    %v159 = vadd.f32 %v157, %v158
    %v160 = vrot.slane %v159, 2
    %v161 = vadd.f32 %v159, %v160
    %v162 = vrot.slane %v161, 1
    %v163 = vadd.f32 %v161, %v162
    %v164 = vmul.f32 %v156, 0.125
    %v165 = vmul.f32 %v163, 0.125
    %v166 = vmul.f32 %v164, %v164
    %v167 = vsub.f32 %v165, %v166
    %v168 = vld [vmem:[%s2] sm:$0x1]
    %v169 = vld [vmem:[%s2 + $0x1] sm:$0x1]
    %v170 = vadd.f32 %v167, 1e-05
    %v171 = vrsqrt.pop %v170
    %v172 = vmul.f32 %v168, %v171
    %v173 = vmul.f32 %v164, %v172
    %v174 = vsub.f32 %v169, %v173
    %v175 = vlaneseq
    %v176 = vshrl.u32 %v175, 7
    %v177 = vsub.s32 0, %v176
    %v178 = vrot.slane %v172, %v177
    %v179 = vmul.f32 %v148, %v178
    %v180 = vlaneseq
    %v181 = vshrl.u32 %v180, 7
    %v182 = vsub.s32 0, %v181
    %v183 = vrot.slane %v174, %v182
    %v184 = vadd.f32 %v179, %v183
    %v185 = vmax.f32 %v184, 0.0
    %v186 = vld [vmem:[%s2 + $0x2] sm:$0x1]
    %v187 = vld [vmem:[#allocation7] sm:$0xff]
    %v188 = vld [vmem:[#allocation7 + $0x8] sm:$0xff]
    %v189 = vld [vmem:[#allocation7 + $0x10] sm:$0xff]
    %v190 = vld [vmem:[#allocation7 + $0x18] sm:$0xff]
    %v191 = vld [vmem:[#allocation7 + $0x20] sm:$0xff]
    %v192 = vld [vmem:[#allocation7 + $0x28] sm:$0xff]
    %v193 = vld [vmem:[#allocation7 + $0x30] sm:$0xff]
    %v194 = vld [vmem:[#allocation7 + $0x38] sm:$0xff]
    %v195 = vld [vmem:[#allocation7 + $0x40] sm:$0xff]
    %v196 = vld [vmem:[#allocation7 + $0x48] sm:$0xff]
    %v197 = vld [vmem:[#allocation7 + $0x50] sm:$0xff]
    %v198 = vld [vmem:[#allocation7 + $0x58] sm:$0xff]
    %v199 = vld [vmem:[#allocation7 + $0x60] sm:$0xff]
    %v200 = vld [vmem:[#allocation7 + $0x68] sm:$0xff]
    %v201 = vld [vmem:[#allocation7 + $0x70] sm:$0xff]
    %v202 = vld [vmem:[#allocation7 + $0x78] sm:$0xff]
    %v203 = vlaneseq
    %v204 = vshrl.u32 %v203, 7
    %v205 = vsub.s32 0, %v204
    %v206 = vrot.slane %v186, %v205
    %207 = vmatprep.subr.mxu0 0.0
    %208 = vmatpush1.msra.mxu0 %v187
    %209 = vmatprep.subr.mxu0 0.0
    %210 = vmatpush1.msra.mxu0 %v188
    %211 = vmatprep.subr.mxu0 0.0
    %212 = vmatpush1.msra.mxu0 %v189
    %213 = vmatprep.subr.mxu0 0.0
    %214 = vmatpush1.msra.mxu0 %v190
    %215 = vmatprep.subr.mxu0 0.0
    %216 = vmatpush1.msra.mxu0 %v191
    %217 = vmatprep.subr.mxu0 0.0
    %218 = vmatpush1.msra.mxu0 %v192
    %219 = vmatprep.subr.mxu0 0.0
    %220 = vmatpush1.msra.mxu0 %v193
    %221 = vmatprep.subr.mxu0 0.0
    %222 = vmatpush1.msra.mxu0 %v194
    %223 = vmatprep.subr.mxu0 0.0
    %224 = vmatpush1.msra.mxu0 %v195
    %225 = vmatprep.subr.mxu0 0.0
    %226 = vmatpush1.msra.mxu0 %v196
    %227 = vmatprep.subr.mxu0 0.0
    %228 = vmatpush1.msra.mxu0 %v197
    %229 = vmatprep.subr.mxu0 0.0
    %230 = vmatpush1.msra.mxu0 %v198
    %231 = vmatprep.subr.mxu0 0.0
    %232 = vmatpush1.msra.mxu0 %v199
    %233 = vmatprep.subr.mxu0 0.0
    %234 = vmatpush1.msra.mxu0 %v200
    %235 = vmatprep.subr.mxu0 0.0
    %236 = vmatpush1.msra.mxu0 %v201
    %237 = vmatprep.subr.mxu0 0.0
    %238 = vmatpush1.msra.mxu0 %v202
    %239 = vmatprep.subr.mxu0 0.0
    %240 = vmatpush1.msra.mxu0 0.0
    %241 = vmatprep.subr.mxu0 0.0
    %242 = vmatpush1.msra.mxu0 0.0
    %243 = vmatprep.subr.mxu0 0.0
    %244 = vmatpush1.msra.mxu0 0.0
    %245 = vmatprep.subr.mxu0 0.0
    %246 = vmatpush1.msra.mxu0 0.0
    %247 = vmatprep.subr.mxu0 0.0
    %248 = vmatpush1.msra.mxu0 0.0
    %249 = vmatprep.subr.mxu0 0.0
    %250 = vmatpush1.msra.mxu0 0.0
    %251 = vmatprep.subr.mxu0 0.0
    %252 = vmatpush1.msra.mxu0 0.0
    %253 = vmatprep.subr.mxu0 0.0
    %254 = vmatpush1.msra.mxu0 0.0
    %255 = vmatprep.subr.mxu0 0.0
    %256 = vmatpush1.msra.mxu0 0.0
    %257 = vmatprep.subr.mxu0 0.0
    %258 = vmatpush1.msra.mxu0 0.0
    %259 = vmatprep.subr.mxu0 0.0
    %260 = vmatpush1.msra.mxu0 0.0
    %261 = vmatprep.subr.mxu0 0.0
    %262 = vmatpush1.msra.mxu0 0.0
    %263 = vmatprep.subr.mxu0 0.0
    %264 = vmatpush1.msra.mxu0 0.0
    %265 = vmatprep.subr.mxu0 0.0
    %266 = vmatpush1.msra.mxu0 0.0
    %267 = vmatprep.subr.mxu0 0.0
    %268 = vmatpush1.msra.mxu0 0.0
    %269 = vmatprep.subr.mxu0 0.0
    %270 = vmatpush1.msra.mxu0 0.0
    %271 = vmatprep.mubr.f32.mxu0 0.0
    %272 = vmatmul.mubr.f32.gmra.mrb[0].mxu0 %v185
    %v273 = vpop.f32.mrb[0].mxu0
    %v274 = vadd.f32 %v206, %v273
    %v275 = vpop.f32.mrb[0].mxu0
    %276 = vdwg.mxu0
    %v277 = vmax.f32 %v274, 0.0
    %v278 = vld [vmem:[%s2 + $0x3] sm:$0x1]
    %v279 = vld [vmem:[#allocation8] sm:$0xff]
    %v280 = vld [vmem:[#allocation8 + $0x8] sm:$0xff]
    %v281 = vld [vmem:[#allocation8 + $0x10] sm:$0xff]
    %v282 = vld [vmem:[#allocation8 + $0x18] sm:$0xff]
    %v283 = vld [vmem:[#allocation8 + $0x20] sm:$0xff]
    %v284 = vld [vmem:[#allocation8 + $0x28] sm:$0xff]
    %v285 = vld [vmem:[#allocation8 + $0x30] sm:$0xff]
    %v286 = vld [vmem:[#allocation8 + $0x38] sm:$0xff]
    %v287 = vld [vmem:[#allocation8 + $0x40] sm:$0xff]
    %v288 = vld [vmem:[#allocation8 + $0x48] sm:$0xff]
    %v289 = vld [vmem:[#allocation8 + $0x50] sm:$0xff]
    %v290 = vld [vmem:[#allocation8 + $0x58] sm:$0xff]
    %v291 = vld [vmem:[#allocation8 + $0x60] sm:$0xff]
    %v292 = vld [vmem:[#allocation8 + $0x68] sm:$0xff]
    %v293 = vld [vmem:[#allocation8 + $0x70] sm:$0xff]
    %v294 = vld [vmem:[#allocation8 + $0x78] sm:$0xff]
    %v295 = vlaneseq
    %v296 = vshrl.u32 %v295, 7
    %v297 = vsub.s32 0, %v296
    %v298 = vrot.slane %v278, %v297
    %299 = vmatprep.subr.mxu0 0.0
    %300 = vmatpush1.msra.mxu0 %v279
    %301 = vmatprep.subr.mxu0 0.0
    %302 = vmatpush1.msra.mxu0 %v280
    %303 = vmatprep.subr.mxu0 0.0
    %304 = vmatpush1.msra.mxu0 %v281
    %305 = vmatprep.subr.mxu0 0.0
    %306 = vmatpush1.msra.mxu0 %v282
    %307 = vmatprep.subr.mxu0 0.0
    %308 = vmatpush1.msra.mxu0 %v283
    %309 = vmatprep.subr.mxu0 0.0
    %310 = vmatpush1.msra.mxu0 %v284
    %311 = vmatprep.subr.mxu0 0.0
    %312 = vmatpush1.msra.mxu0 %v285
    %313 = vmatprep.subr.mxu0 0.0
    %314 = vmatpush1.msra.mxu0 %v286
    %315 = vmatprep.subr.mxu0 0.0
    %316 = vmatpush1.msra.mxu0 %v287
    %317 = vmatprep.subr.mxu0 0.0
    %318 = vmatpush1.msra.mxu0 %v288
    %319 = vmatprep.subr.mxu0 0.0
    %320 = vmatpush1.msra.mxu0 %v289
    %321 = vmatprep.subr.mxu0 0.0
    %322 = vmatpush1.msra.mxu0 %v290
    %323 = vmatprep.subr.mxu0 0.0
    %324 = vmatpush1.msra.mxu0 %v291
    %325 = vmatprep.subr.mxu0 0.0
    %326 = vmatpush1.msra.mxu0 %v292
    %327 = vmatprep.subr.mxu0 0.0
    %328 = vmatpush1.msra.mxu0 %v293
    %329 = vmatprep.subr.mxu0 0.0
    %330 = vmatpush1.msra.mxu0 %v294
    %331 = vmatprep.subr.mxu0 0.0
    %332 = vmatpush1.msra.mxu0 0.0
    %333 = vmatprep.subr.mxu0 0.0
    %334 = vmatpush1.msra.mxu0 0.0
    %335 = vmatprep.subr.mxu0 0.0
    %336 = vmatpush1.msra.mxu0 0.0
    %337 = vmatprep.subr.mxu0 0.0
    %338 = vmatpush1.msra.mxu0 0.0
    %339 = vmatprep.subr.mxu0 0.0
    %340 = vmatpush1.msra.mxu0 0.0
    %341 = vmatprep.subr.mxu0 0.0
    %342 = vmatpush1.msra.mxu0 0.0
    %343 = vmatprep.subr.mxu0 0.0
    %344 = vmatpush1.msra.mxu0 0.0
    %345 = vmatprep.subr.mxu0 0.0
    %346 = vmatpush1.msra.mxu0 0.0
    %347 = vmatprep.subr.mxu0 0.0
    %348 = vmatpush1.msra.mxu0 0.0
    %349 = vmatprep.subr.mxu0 0.0
    %350 = vmatpush1.msra.mxu0 0.0
    %351 = vmatprep.subr.mxu0 0.0
    %352 = vmatpush1.msra.mxu0 0.0
    %353 = vmatprep.subr.mxu0 0.0
    %354 = vmatpush1.msra.mxu0 0.0
    %355 = vmatprep.subr.mxu0 0.0
    %356 = vmatpush1.msra.mxu0 0.0
    %357 = vmatprep.subr.mxu0 0.0
    %358 = vmatpush1.msra.mxu0 0.0
    %359 = vmatprep.subr.mxu0 0.0
    %360 = vmatpush1.msra.mxu0 0.0
    %361 = vmatprep.subr.mxu0 0.0
    %362 = vmatpush1.msra.mxu0 0.0
    %363 = vmatprep.mubr.f32.mxu0 0.0
    %364 = vmatmul.mubr.f32.gmra.mrb[0].mxu0 %v277
    %v365 = vpop.f32.mrb[0].mxu0
    %v366 = vadd.f32 %v298, %v365
    %v367 = vpop.f32.mrb[0].mxu0
    %368 = vdwg.mxu0
    %v369 = vtanh.pop %v366
    %370 = vst [vmem:[#allocation10] sm:$0xff] %v369
    // Predicated region
    $region38: #{actor_forward.1} parent=1 // pred_check
      _
    $region39: #{actor_forward.1} parent=1 // pred_check_branch
      %372 = sbr.rel (0) target = $region41
    $region40: #{actor_forward.1} parent=1 // pred_region
      %s374 = ssub.s32 128, 128
      %375 = vsyncadd [#allocation4], %s374
      %s377 = sshll.u32 [#allocation10], 4
      %s378 = int_to_ptr.vmem [resolvable:$true] %s377
      %380 = dma.vmem_to_hbm [thread:$0]  %s378, 128, %s5, [#allocation4]
    $region41: #{actor_forward.1} parent=1 // pred_fallthru
      _
    // Predicated region
    $region42: #{actor_forward.1} parent=1 // pred_check
      _
    $region43: #{actor_forward.1} parent=1 // pred_check_branch
      %382 = sbr.rel (0) target = $region45
    $region44: #{actor_forward.1} parent=1 // pred_region
      %383 = dma.done [#allocation4], 128
    $region45: #{actor_forward.1} parent=1 // pred_fallthru
      _
    %384 = vsyncpa [#allocation3], 1
    %385 = vsyncpa [#allocation6], 1
    %386 = vsyncpa [#allocation9], 1
    %387 = vsyncpa [#allocation4], 1

</llo_original>
